<compile_context>
chip_gen: v6e
topology: v6e:2x2x1
jax: 0.10.0
libtpu: 0.0.40
codegen_flags: <defaults>
</compile_context>

<pallas_src>
import functools

import jax
import jax.numpy as jnp
from jax.experimental import pallas as pl
from jax.experimental.pallas import tpu as pltpu


# ----------------------------------------------------------------------------
# Tile-size heuristic (shared): batch-block TB.
# ----------------------------------------------------------------------------
def _pick_batch_tile(N, L, C, *, extra_cols=0, vmem_budget_bytes=24 * 1024 * 1024):
    """Pick TB so that TB*L >= 256 MXU rows where possible, the grid keeps >= 2 steps
    when N allows (v7x has 2 TensorCores), the double-buffered in/out blocks stay under
    a VMEM budget (v7x scoped default is the tightest), and TB divides N (no ragged edge)."""
    tb = max(1, pl.cdiv(256, L))
    if N >= 2:
        tb = min(tb, max(1, N // 2))   # keep >= 2 grid steps for megacore sharding
    tb = min(tb, N)
    per_batch_bytes = L * (C + extra_cols) * 4
    while tb > 1 and 4 * tb * per_batch_bytes > vmem_budget_bytes:  # 2x dbl-buffer, in+out
        tb //= 2
    while N % tb:
        tb -= 1
    return tb


# ----------------------------------------------------------------------------
# 1) Aff module:  y = x * alpha + beta
# ----------------------------------------------------------------------------
def aff_kernel(alpha_ref, beta_ref, x_ref, o_ref):
    # x block: (TB, L, C); alpha/beta: (1, C) broadcast over (TB, L, C).
    o_ref[...] = (x_ref[...] * alpha_ref[...] + beta_ref[...]).astype(o_ref.dtype)


def aff(x, alpha, beta, *, tb=None):
    """Pallas forward of the PyTorch `Aff` module. x: (N, L, C); alpha/beta: (1, 1, C)."""
    N, L, C = x.shape
    a2 = alpha.reshape(1, C).astype(jnp.float32)
    b2 = beta.reshape(1, C).astype(jnp.float32)
    if tb is None:
        tb = _pick_batch_tile(N, L, C)
    grid = (pl.cdiv(N, tb),)

    bytes_accessed = 2 * int(x.size) * x.dtype.itemsize + 2 * (int(a2.size) + int(b2.size)) * 4
    return pl.pallas_call(
        aff_kernel,
        out_shape=jax.ShapeDtypeStruct((N, L, C), x.dtype),
        grid_spec=pltpu.PrefetchScalarGridSpec(
            num_scalar_prefetch=0,
            grid=grid,
            in_specs=[
                pl.BlockSpec((1, C), lambda n: (0, 0)),        # alpha (constant block)
                pl.BlockSpec((1, C), lambda n: (0, 0)),        # beta  (constant block)
                pl.BlockSpec((tb, L, C), lambda n: (n, 0, 0)),  # x batch block
            ],
            out_specs=pl.BlockSpec((tb, L, C), lambda n: (n, 0, 0)),
        ),
        compiler_params=pltpu.CompilerParams(
            dimension_semantics=("parallel",),
            vmem_limit_bytes=64 * 1024 * 1024,
        ),
        cost_estimate=pl.CostEstimate(
            flops=2 * N * L * C, transcendentals=0, bytes_accessed=bytes_accessed),
    )(a2, b2, x)


# ----------------------------------------------------------------------------
# 2) Fused ResMLP MLPBlock (CrossPatch + CrossChannel); uses Aff semantics 3x.
# ----------------------------------------------------------------------------
def mlpblock_kernel(x_ref,
                    a1_ref, b1_ref,      # Aff1 (CrossPatch pre)
                    wp_ref, bp_ref,      # Linear(L, L) over the patch axis (bf16 weight)
                    a2_ref, b2_ref,      # Aff2 (CrossPatch post)
                    a3_ref, b3_ref,      # Aff3 (CrossChannel pre)
                    w1_ref, bb1_ref,     # Linear(C -> H), pre-transposed (C, H), bf16
                    w2_ref, bb2_ref,     # Linear(H -> C), pre-transposed (H, C), bf16
                    o_ref,
                    *, approximate_gelu=False):
    tb, L, C = x_ref.shape
    x = x_ref[...]                                                   # (TB, L, C) f32

    # ---- CrossPatch: y = x + Aff2(Wp @ Aff1(x)) ------------------------------
    u = x * a1_ref[...] + b1_ref[...]                                # Aff (f32)
    wp3 = jnp.broadcast_to(wp_ref[...], (tb, L, L))                  # bf16 batched matmul
    v = jnp.einsum("bml,blc->bmc", wp3, u.astype(jnp.bfloat16),
                   preferred_element_type=jnp.float32) + bp_ref[...]
    y = x + (v * a2_ref[...] + b2_ref[...])                          # Aff + residual (f32)

    # ---- CrossChannel: out = y + W2 @ GELU(W1 @ Aff3(y)) ---------------------
    # Flatten (TB, L, C) -> (TB*L, C): MXU M dim = TB*L, lane-dense store slab.
    y2 = y.reshape(tb * L, C)
    u2 = (y2 * a3_ref[...] + b3_ref[...]).astype(jnp.bfloat16)       # Aff (f32) -> bf16
    h = jnp.dot(u2, w1_ref[...], preferred_element_type=jnp.float32) + bb1_ref[...]
    h = jax.nn.gelu(h, approximate=approximate_gelu)                 # default: exact == nn.GELU()
    z = jnp.dot(h.astype(jnp.bfloat16), w2_ref[...],
                preferred_element_type=jnp.float32) + bb2_ref[...]
    o_ref[...] = (y2 + z).reshape(tb, L, C).astype(o_ref.dtype)      # residual, f32 out


def mlp_block(x, params, *, tb=None, approximate_gelu=False):
    """x: (N, L, C) float32. params: dict of pre-laid-out parameter arrays (f32)."""
    N, L, C = x.shape
    H = params["w1_t"].shape[1]
    if tb is None:
        # TB is a per-generation tunable; this heuristic targets the tightest (v7x) budget.
        tb = _pick_batch_tile(N, L, C, extra_cols=H)
    grid = (pl.cdiv(N, tb),)

    # bf16 MXU operands (weights cast once here -> half the weight DMA bytes);
    # accumulation stays f32 via preferred_element_type inside the kernel.
    wp = params["wp"].astype(jnp.bfloat16)
    w1 = params["w1_t"].astype(jnp.bfloat16)
    w2 = params["w2_t"].astype(jnp.bfloat16)

    param_order = [
        params["aff1_a"], params["aff1_b"],
        wp, params["bp"],
        params["aff2_a"], params["aff2_b"],
        params["aff3_a"], params["aff3_b"],
        w1, params["b1"],
        w2, params["b2"],
    ]

    def full_spec(arr):
        # Whole (small) parameter array resident in VMEM every grid step (constant index_map,
        # so it is fetched once). TODO(synk): single-buffer these constants (pl.Buffered(1))
        # to halve their VMEM footprint on v7x with C=768/H=3072-scale weights.
        return pl.BlockSpec(arr.shape, lambda n: (0,) * arr.ndim)

    x_bytes = int(x.size) * x.dtype.itemsize
    param_bytes = sum(int(p.size) * p.dtype.itemsize for p in param_order)
    flops = 2 * N * L * (L * C + 2 * C * H) + 10 * N * L * C

    return pl.pallas_call(
        functools.partial(mlpblock_kernel, approximate_gelu=approximate_gelu),
        out_shape=jax.ShapeDtypeStruct((N, L, C), x.dtype),
        grid_spec=pltpu.PrefetchScalarGridSpec(
            num_scalar_prefetch=0,
            grid=grid,
            in_specs=[pl.BlockSpec((tb, L, C), lambda n: (n, 0, 0))]
                     + [full_spec(p) for p in param_order],
            out_specs=pl.BlockSpec((tb, L, C), lambda n: (n, 0, 0)),
        ),
        compiler_params=pltpu.CompilerParams(
            dimension_semantics=("parallel",),
            vmem_limit_bytes=64 * 1024 * 1024,
        ),
        cost_estimate=pl.CostEstimate(
            flops=int(flops),
            transcendentals=int(N * L * H),
            bytes_accessed=int(2 * x_bytes + param_bytes)),
    )(x, *param_order)


# ----------------------------------------------------------------------------
# Parameter init + pure-JAX references
# ----------------------------------------------------------------------------
def init_params(key, C, L, H):
    """Deterministic parameter init. Aff: alpha=1, beta=0. Linears: small normals."""
    k1, k2, k3, k4, k5, k6 = jax.random.split(key, 6)
    return {
        # Aff parameters, stored as (1, C) for broadcasting against (..., L, C)
        "aff1_a": jnp.ones((1, C), jnp.float32),
        "aff1_b": jnp.zeros((1, C), jnp.float32),
        "aff2_a": jnp.ones((1, C), jnp.float32),
        "aff2_b": jnp.zeros((1, C), jnp.float32),
        "aff3_a": jnp.ones((1, C), jnp.float32),
        "aff3_b": jnp.zeros((1, C), jnp.float32),
        # CrossPatch Linear(L, L): torch weight is (L_out, L_in) -> used as Wp @ u
        "wp": jax.random.normal(k1, (L, L), jnp.float32) * 0.1,
        "bp": (jax.random.normal(k2, (L,), jnp.float32) * 0.1).reshape(L, 1),
        # CrossChannel Linear(C -> H): torch weight (H, C); pre-transposed to (C, H)
        "w1_t": (jax.random.normal(k3, (H, C), jnp.float32) * 0.1).T,
        "b1": (jax.random.normal(k4, (H,), jnp.float32) * 0.1).reshape(1, H),
        # CrossChannel Linear(H -> C): torch weight (C, H); pre-transposed to (H, C)
        "w2_t": (jax.random.normal(k5, (C, H), jnp.float32) * 0.1).T,
        "b2": (jax.random.normal(k6, (C,), jnp.float32) * 0.1).reshape(1, C),
    }


def reference_forward(x, p):
    """Pure-JAX f32 reference mirroring the PyTorch MLPBlock (eval mode)."""
    u = x * p["aff1_a"][None] + p["aff1_b"][None]
    v = jnp.einsum("ml,nlc->nmc", p["wp"], u) + p["bp"][None]
    y = x + (v * p["aff2_a"][None] + p["aff2_b"][None])
    u2 = y * p["aff3_a"][None] + p["aff3_b"][None]
    h = jax.nn.gelu(u2 @ p["w1_t"] + p["b1"][None], approximate=False)
    return y + (h @ p["w2_t"] + p["b2"][None])


if __name__ == "__main__":
    # SMALL demo shapes; real ResMLP sizes (L=196, C=384/768, H=4C) keep the output
    # last dim a multiple of 128 (lane-dense stores) -- the C=16 path here is test-only.
    N, L, C, H = 8, 8, 16, 32
    key = jax.random.PRNGKey(0)
    kx, ka, kb, kp = jax.random.split(key, 4)
    x = jax.random.normal(kx, (N, L, C), jnp.float32)

    # --- Aff module (the spec) -----------------------------------------------
    alpha = 1.0 + 0.1 * jax.random.normal(ka, (1, 1, C), jnp.float32)
    beta = 0.1 * jax.random.normal(kb, (1, 1, C), jnp.float32)
    y = jax.block_until_ready(aff(x, alpha, beta))
    y_ref = x * alpha + beta
    assert y.shape == x.shape
    assert jnp.allclose(y, y_ref, atol=1e-6, rtol=1e-6), "Aff kernel mismatch"

    # --- Fused MLPBlock (Aff used three times inside) -------------------------
    params = init_params(kp, C, L, H)
    out = jax.block_until_ready(mlp_block(x, params))
    ref = reference_forward(x, params)
    assert out.shape == (N, L, C)
    max_err = float(jnp.max(jnp.abs(out - ref)))
    # bf16 MXU operands with f32 accumulation -> relaxed tolerance vs the f32 reference.
    assert max_err < 3e-2, f"MLPBlock kernel mismatch vs f32 reference: {max_err}"

    print("KERNEL_OK")
</pallas_src>

<mosaic_0001>
module attributes {stable_mosaic.version = 11 : i64} {
  func.func @aff_kernel(%arg0: i32, %arg1: memref<1x16xf32, #tpu.memory_space<vmem>>, %arg2: memref<1x16xf32, #tpu.memory_space<vmem>>, %arg3: memref<4x8x16xf32, #tpu.memory_space<vmem>>, %arg4: memref<4x8x16xf32, #tpu.memory_space<vmem>>) attributes {dimension_semantics = [#tpu.dimension_semantics<parallel>], iteration_bounds = array<i64: 2>, scalar_prefetch = 0 : i64, scratch_operands = 0 : i64, tpu.core_type = #tpu.core_type<tc>, window_params = [{pipeline_mode = #tpu.pipeline_mode<synchronous>, transform_indices = @transform_0, window_bounds = array<i64: 1, 16>}, {pipeline_mode = #tpu.pipeline_mode<synchronous>, transform_indices = @transform_1, window_bounds = array<i64: 1, 16>}, {transform_indices = @transform_2, window_bounds = array<i64: 4, 8, 16>}, {transform_indices = @transform_3, window_bounds = array<i64: 4, 8, 16>}]} {
    %c0 = arith.constant 0 : index
    %c0_0 = arith.constant 0 : index
    %c0_1 = arith.constant 0 : index
    %0 = vector.load %arg3[%c0, %c0_0, %c0_1] : memref<4x8x16xf32, #tpu.memory_space<vmem>>, vector<4x8x16xf32>
    %c0_2 = arith.constant 0 : index
    %c0_3 = arith.constant 0 : index
    %1 = vector.load %arg1[%c0_2, %c0_3] : memref<1x16xf32, #tpu.memory_space<vmem>>, vector<1x16xf32>
    %2 = vector.shape_cast %1 : vector<1x16xf32> to vector<1x1x16xf32>
    %3 = vector.broadcast %2 : vector<1x1x16xf32> to vector<4x8x16xf32>
    %4 = arith.mulf %0, %3 : vector<4x8x16xf32>
    %c0_4 = arith.constant 0 : index
    %c0_5 = arith.constant 0 : index
    %5 = vector.load %arg2[%c0_4, %c0_5] : memref<1x16xf32, #tpu.memory_space<vmem>>, vector<1x16xf32>
    %6 = vector.shape_cast %5 : vector<1x16xf32> to vector<1x1x16xf32>
    %7 = vector.broadcast %6 : vector<1x1x16xf32> to vector<4x8x16xf32>
    %8 = arith.addf %4, %7 : vector<4x8x16xf32>
    %c0_6 = arith.constant 0 : index
    %c0_7 = arith.constant 0 : index
    %c0_8 = arith.constant 0 : index
    %9 = vector.load %arg4[%c0_6, %c0_7, %c0_8] : memref<4x8x16xf32, #tpu.memory_space<vmem>>, vector<4x8x16xf32>
    tpu.vector_store %arg4[%c0_6, %c0_7, %c0_8], %8 {strides = array<i32>} : memref<4x8x16xf32, #tpu.memory_space<vmem>>, vector<4x8x16xf32>,
    return
  }
  func.func @transform_0(%arg0: i32) -> (i32, i32) {
    %c0_i32 = arith.constant 0 : i32
    %c0_i32_0 = arith.constant 0 : i32
    %c0_i32_1 = arith.constant 0 : i32
    return %c0_i32, %c0_i32_0 : i32, i32
  }
  func.func @transform_1(%arg0: i32) -> (i32, i32) {
    %c0_i32 = arith.constant 0 : i32
    %c0_i32_0 = arith.constant 0 : i32
    %c0_i32_1 = arith.constant 0 : i32
    return %c0_i32, %c0_i32_0 : i32, i32
  }
  func.func @transform_2(%arg0: i32) -> (i32, i32, i32) {
    %c0_i32 = arith.constant 0 : i32
    %c0_i32_0 = arith.constant 0 : i32
    %c0_i32_1 = arith.constant 0 : i32
    return %arg0, %c0_i32, %c0_i32_0 : i32, i32, i32
  }
  func.func @transform_3(%arg0: i32) -> (i32, i32, i32) {
    %c0_i32 = arith.constant 0 : i32
    %c0_i32_0 = arith.constant 0 : i32
    %c0_i32_1 = arith.constant 0 : i32
    return %arg0, %c0_i32, %c0_i32_0 : i32, i32, i32
  }
}

</mosaic_0001>

<llo_original>
// kernel: tpu_custom_call.1
$region0: #{tpu_custom_call.1}
  #allocation0 [shape = 'u32[]', space=smem, size = 0x4, offset = 0x4, fixed_abs, tag = 'smem constant byte address 0x4 - core index']
  #allocation1 [shape = 'u32[144,128]{1,0:T(1,128)}', space=vmem, size = 0x12000, scoped, tag = 'internal scratch']
  %s0 = inlined_call_operand.hbm [shape: f32[1,16], index: 0, kind: input, shape index: {}]
  %s1 = inlined_call_operand.vmem [shape: f32[1,16], index: 1, kind: input, shape index: {}]
  %s2 = inlined_call_operand.hbm [shape: f32[8,8,16], index: 2, kind: input, shape index: {}]
  %s3 = inlined_call_operand.hbm [shape: f32[8,8,16], index: 3, kind: output, shape index: {}]
  %s4 = sld [smem:[#allocation0]]
  $region53: #{tpu_custom_call.1} parent=0
    _
  %s6 = ssub.s32 1, %s4
  %s7 = scalar_select 0, %s6, %s4
  $region1: #{tpu_custom_call.1} parent=0
    #allocation2 [shape = 'u8[512]{0}', space=vmem, size = 0x400, scoped, tag = 'input window, operand 0, single buffered']
    #allocation3 [shape = 's32[2]{0}', space=sflag, size = 0x8, scoped, tag = 'scoped memory for tpu_custom_call.1']
    #allocation4 [shape = 's32[2]{0}', space=sflag, size = 0x8, scoped, tag = 'scoped memory for tpu_custom_call.1']
    #allocation5 [shape = 'u8[32768]{0}', space=vmem, size = 0x8000, scoped, tag = 'input window, operand 2']
    #allocation6 [shape = 's32[2]{0}', space=sflag, size = 0x8, scoped, tag = 'scoped memory for tpu_custom_call.1']
    #allocation7 [shape = 'u8[32768]{0}', space=vmem, size = 0x8000, scoped, tag = 'output window, operand 0']
    %8 = vsyncpa [#allocation3], 0
    %9 = vsyncpa [#allocation6], 0
    %s10 = scalar_lea.sflag [#allocation6], 1
    %11 = vsyncpa %s10, 0
    %12 = vsyncpa [#allocation4], 0
    %s13 = scalar_lea.sflag [#allocation4], 1
    %14 = vsyncpa %s13, 0
    loop: start=0, step=1, limit=4
    $region2: #{tpu_custom_call.1} parent=1 // loop_pre_header
      _
    $region3: #{tpu_custom_call.1} parent=1 // loop_header
      %s16 = sphi 0, %s20
      %p17 = scmp.ge.s32.totalorder %s16, 4
      %s24 = sphi 0, %s24
      %s26 = sphi 0, %s24
      %s27 = sphi 0, %s26
      %s41 = sphi 0, %s27
      %s45 = sphi 0, %s45
      %s47 = sphi 0, %s45
      %s48 = sphi 0, %s47
      %s62 = sphi 0, %s48
      %s68 = sphi 0, %s70
      %s71 = sphi 0, %s68
      %s72 = sphi 0, %s71
      %s88 = sphi 0, %s72
      %s94 = sphi 0, %s96
      %s97 = sphi 0, %s94
      %s98 = sphi 0, %s97
      %s114 = sphi 0, %s98
    $region4: #{tpu_custom_call.1} parent=1 // loop_header_branch
      %19 = sbr.rel (%p17) target = $region8
    $region5: #{tpu_custom_call.1} parent=1 // loop_body
      %s21 = ssub.s32 %s16, 1
      %s22 = ssub.s32 %s16, 2
      %s23 = sadd.s32 %s16, 1
      %s25 = sadd.s32 %s24, 1
      %p28 = scmp.eq.s32.totalorder %s16, 1
      %p29 = scmp.ne.s32.totalorder %s24, %s26
      %p30 = scmp.eq.s32.totalorder %s16, 0
      %p31 = por %p29, %p30
      %p32 = scmp.ne.s32.totalorder %s24, %s26
      %p33 = scmp.eq.s32.totalorder %s21, 1
      %p34 = por %p32, %p33
      %p35 = scmp.ne.s32.totalorder %s26, %s27
      %p36 = scmp.eq.s32.totalorder %s21, 0
      %p37 = por %p35, %p36
      %p38 = scmp.ne.s32.totalorder %s26, %s27
      %p39 = scmp.eq.s32.totalorder %s22, 1
      %p40 = por %p38, %p39
      %p42 = scmp.ne.s32.totalorder %s27, %s41
      %p43 = scmp.eq.s32.totalorder %s22, 0
      %p44 = por %p42, %p43
      %s46 = sadd.s32 %s45, 1
      %p49 = scmp.eq.s32.totalorder %s16, 1
      %p50 = scmp.ne.s32.totalorder %s45, %s47
      %p51 = scmp.eq.s32.totalorder %s16, 0
      %p52 = por %p50, %p51
      %p53 = scmp.ne.s32.totalorder %s45, %s47
      %p54 = scmp.eq.s32.totalorder %s21, 1
      %p55 = por %p53, %p54
      %p56 = scmp.ne.s32.totalorder %s47, %s48
      %p57 = scmp.eq.s32.totalorder %s21, 0
      %p58 = por %p56, %p57
      %p59 = scmp.ne.s32.totalorder %s47, %s48
      %p60 = scmp.eq.s32.totalorder %s22, 1
      %p61 = por %p59, %p60
      %p63 = scmp.ne.s32.totalorder %s48, %s62
      %p64 = scmp.eq.s32.totalorder %s22, 0
      %p65 = por %p63, %p64
      %s66 = ssub.s32 %s16, %s23
      %p67 = scmp.eq.s32.totalorder %s66, 0
      %s69 = sadd.s32 %s68, 1
      %s70 = scalar_select %p67, %s68, %s69
      %p73 = pneg %p67
      %p74 = scmp.eq.s32.totalorder %s16, 1
      %p75 = por %p73, %p74
      %p76 = scmp.ne.s32.totalorder %s68, %s71
      %p77 = scmp.eq.s32.totalorder %s16, 0
      %p78 = por %p76, %p77
      %p79 = scmp.ne.s32.totalorder %s68, %s71
      %p80 = scmp.eq.s32.totalorder %s21, 1
      %p81 = por %p79, %p80
      %p82 = scmp.ne.s32.totalorder %s71, %s72
      %p83 = scmp.eq.s32.totalorder %s21, 0
      %p84 = por %p82, %p83
      %p85 = scmp.ne.s32.totalorder %s71, %s72
      %p86 = scmp.eq.s32.totalorder %s22, 1
      %p87 = por %p85, %p86
      %p89 = scmp.ne.s32.totalorder %s72, %s88
      %p90 = scmp.eq.s32.totalorder %s22, 0
      %p91 = por %p89, %p90
      %s92 = ssub.s32 %s16, %s23
      %p93 = scmp.eq.s32.totalorder %s92, 0
      %s95 = sadd.s32 %s94, 1
      %s96 = scalar_select %p93, %s94, %s95
      %p99 = pneg %p93
      %p100 = scmp.eq.s32.totalorder %s16, 1
      %p101 = por %p99, %p100
      %p102 = scmp.ne.s32.totalorder %s94, %s97
      %p103 = scmp.eq.s32.totalorder %s16, 0
      %p104 = por %p102, %p103
      %p105 = scmp.ne.s32.totalorder %s94, %s97
      %p106 = scmp.eq.s32.totalorder %s21, 1
      %p107 = por %p105, %p106
      %p108 = scmp.ne.s32.totalorder %s97, %s98
      %p109 = scmp.eq.s32.totalorder %s21, 0
      %p110 = por %p108, %p109
      %p111 = scmp.ne.s32.totalorder %s97, %s98
      %p112 = scmp.eq.s32.totalorder %s22, 1
      %p113 = por %p111, %p112
      %p115 = scmp.ne.s32.totalorder %s98, %s114
      %p116 = scmp.eq.s32.totalorder %s22, 0
      %p117 = por %p115, %p116
      %p118 = scmp.le.s32.totalorder 1, %s16
      %p119 = scmp.lt.s32.totalorder %s16, 3
      %p120 = pnand %p118, %p119
      %p121 = pneg %p120
      // Predicated region
      $region9: #{tpu_custom_call.1} parent=5 // pred_check
        _
      $region10: #{tpu_custom_call.1} parent=5 // pred_check_branch
        %123 = sbr.rel (%p120) target = $region12
      $region11: #{tpu_custom_call.1} parent=5 // pred_region
        %s124 = ssub.s32 %s16, 1
        // Predicated region
        $region13: #{tpu_custom_call.1} parent=11 // pred_check
          %p125 = pneg %p37
        $region14: #{tpu_custom_call.1} parent=11 // pred_check_branch
          %127 = sbr.rel (%p125) target = $region16
        $region15: #{tpu_custom_call.1} parent=11 // pred_region
          %s129 = ssub.s32 16, 16
          %130 = vsyncadd [#allocation3], %s129
          %s132 = sshll.u32 [#allocation2], 4
          %s133 = int_to_ptr.vmem [resolvable:$true] %s132
          %135 = dma.hbm_to_vmem [thread:$0]  %s0, 16, %s133, [#allocation3]
        $region16: #{tpu_custom_call.1} parent=11 // pred_fallthru
          _
        // Predicated region
        $region17: #{tpu_custom_call.1} parent=11 // pred_check
          %p136 = pneg %p58
        $region18: #{tpu_custom_call.1} parent=11 // pred_check_branch
          %138 = sbr.rel (%p136) target = $region20
        $region19: #{tpu_custom_call.1} parent=11 // pred_region
          _
        $region20: #{tpu_custom_call.1} parent=11 // pred_fallthru
          _
      $region12: #{tpu_custom_call.1} parent=5 // pred_fallthru
        _
      %p139 = scmp.lt.s32.totalorder %s16, 2
      // Predicated region
      $region21: #{tpu_custom_call.1} parent=5 // pred_check
        %p140 = pneg %p139
      $region22: #{tpu_custom_call.1} parent=5 // pred_check_branch
        %142 = sbr.rel (%p140) target = $region24
      $region23: #{tpu_custom_call.1} parent=5 // pred_region
        // Predicated region
        $region25: #{tpu_custom_call.1} parent=23 // pred_check
          %p143 = pneg %p78
        $region26: #{tpu_custom_call.1} parent=23 // pred_check_branch
          %145 = sbr.rel (%p143) target = $region28
        $region27: #{tpu_custom_call.1} parent=23 // pred_region
          %s146 = sand.u32 %s68, 1
          %s147 = scalar_lea.sflag [#allocation6], %s146
          %s148 = sand.u32 %s68, 1
          %s149 = smul.addr %s148, 32
          %s150 = scalar_lea.vmem [#allocation5], %s149
          %s151 = smul.u32 4, %s16
          %s153 = ssub.s32 512, 512
          %154 = vsyncadd %s147, %s153
          %s155 = smul.addr %s151, 128
          %s156 = scalar_lea.hbm %s2, %s155
          %s157 = sshll.u32 %s150, 4
          %s158 = int_to_ptr.vmem [resolvable:$true] %s157
          %163 = dma.hbm_to_vmem [thread:$0]  %s156, 512, %s158, %s147, 128, 128, 8
        $region28: #{tpu_custom_call.1} parent=23 // pred_fallthru
          _
      $region24: #{tpu_custom_call.1} parent=5 // pred_fallthru
        _
      %p164 = scmp.le.s32.totalorder 1, %s16
      %p165 = scmp.lt.s32.totalorder %s16, 3
      %p166 = pnand %p164, %p165
      %p167 = pneg %p166
      // Predicated region
      $region29: #{tpu_custom_call.1} parent=5 // pred_check
        _
      $region30: #{tpu_custom_call.1} parent=5 // pred_check_branch
        %169 = sbr.rel (%p166) target = $region32
      $region31: #{tpu_custom_call.1} parent=5 // pred_region
        %s170 = ssub.s32 %s16, 1
        // Predicated region
        $region33: #{tpu_custom_call.1} parent=31 // pred_check
          %p171 = pneg %p37
        $region34: #{tpu_custom_call.1} parent=31 // pred_check_branch
          %173 = sbr.rel (%p171) target = $region36
        $region35: #{tpu_custom_call.1} parent=31 // pred_region
          %174 = dma.done [#allocation3], 16
        $region36: #{tpu_custom_call.1} parent=31 // pred_fallthru
          _
        %s175 = sand.u32 %s71, 1
        %s176 = scalar_lea.sflag [#allocation6], %s175
        %s177 = sand.u32 %s71, 1
        %s178 = smul.addr %s177, 32
        %s179 = scalar_lea.vmem [#allocation5], %s178
        // Predicated region
        $region37: #{tpu_custom_call.1} parent=31 // pred_check
          %p180 = pneg %p84
        $region38: #{tpu_custom_call.1} parent=31 // pred_check_branch
          %182 = sbr.rel (%p180) target = $region40
        $region39: #{tpu_custom_call.1} parent=31 // pred_region
          %183 = dma.done %s176, 512
        $region40: #{tpu_custom_call.1} parent=31 // pred_fallthru
          _
        %p184 = pneg %p37
        %p185 = pneg %p34
        %p186 = pneg %p58
        %p187 = pneg %p55
        %s188 = sand.u32 %s71, 1
        %s189 = scalar_lea.sflag [#allocation6], %s188
        %s190 = sand.u32 %s71, 1
        %s191 = smul.addr %s190, 32
        %s192 = scalar_lea.vmem [#allocation5], %s191
        %p193 = pneg %p84
        %p194 = pneg %p81
        %p195 = pneg %p110
        %p196 = pneg %p107
        %s197 = sand.u32 %s97, 1
        %s198 = scalar_lea.sflag [#allocation4], %s197
        %s199 = sand.u32 %s97, 1
        %s200 = smul.addr %s199, 32
        %s201 = scalar_lea.vmem [#allocation7], %s200
        %s202 = smul.u32 4, %s21
        %s203 = smul.u32 4, %s21
        %v204 = vld [vmem:[%s179] sm:$0xff]
        %v205 = vld [vmem:[%s179 + $0x8] sm:$0xff]
        %v206 = vld [vmem:[%s179 + $0x10] sm:$0xff]
        %v207 = vld [vmem:[%s179 + $0x18] sm:$0xff]
        %v208 = vld [vmem:[#allocation2] sm:$0x1]
        %v210 = vlaneseq
        %v211 = vshrl.u32 %v210, 7
        %v212 = vsub.s32 0, %v211
        %v213 = vrot.slane %v208, %v212
        %v215 = vmul.f32 %v204, %v213
        %v216 = vmul.f32 %v205, %v213
        %v217 = vmul.f32 %v206, %v213
        %v218 = vmul.f32 %v207, %v213
        %v219 = vld [vmem:[%s1] sm:$0x1]
        %v221 = vlaneseq
        %v222 = vshrl.u32 %v221, 7
        %v223 = vsub.s32 0, %v222
        %v224 = vrot.slane %v219, %v223
        %v226 = vadd.f32 %v215, %v224
        %v227 = vadd.f32 %v216, %v224
        %v228 = vadd.f32 %v217, %v224
        %v229 = vadd.f32 %v218, %v224
        %vm230 = vcmask 130048
        %231 = vst.msk [vmem:[%s201] sm:$0xff] %vm230, %v226
        %232 = vst.msk [vmem:[%s201 + $0x8] sm:$0xff] %vm230, %v227
        %233 = vst.msk [vmem:[%s201 + $0x10] sm:$0xff] %vm230, %v228
        %234 = vst.msk [vmem:[%s201 + $0x18] sm:$0xff] %vm230, %v229
        %s235 = sand.u32 %s97, 1
        %s236 = scalar_lea.sflag [#allocation4], %s235
        %s237 = sand.u32 %s97, 1
        %s238 = smul.addr %s237, 32
        %s239 = scalar_lea.vmem [#allocation7], %s238
        // Predicated region
        $region41: #{tpu_custom_call.1} parent=31 // pred_check
          %p240 = pneg %p107
        $region42: #{tpu_custom_call.1} parent=31 // pred_check_branch
          %242 = sbr.rel (%p240) target = $region44
        $region43: #{tpu_custom_call.1} parent=31 // pred_region
          %s243 = smul.u32 4, %s21
          %s245 = ssub.s32 512, 512
          %246 = vsyncadd %s236, %s245
          %s247 = smul.addr %s243, 128
          %s248 = scalar_lea.hbm %s3, %s247
          %s249 = sshll.u32 %s239, 4
          %s250 = int_to_ptr.vmem [resolvable:$true] %s249
          %255 = dma.vmem_to_hbm [thread:$0]  %s250, 512, %s248, %s236, 128, 128, 8
        $region44: #{tpu_custom_call.1} parent=31 // pred_fallthru
          _
      $region32: #{tpu_custom_call.1} parent=5 // pred_fallthru
        _
      %p256 = scmp.le.s32.totalorder 2, %s16
      // Predicated region
      $region45: #{tpu_custom_call.1} parent=5 // pred_check
        %p257 = pneg %p256
      $region46: #{tpu_custom_call.1} parent=5 // pred_check_branch
        %259 = sbr.rel (%p257) target = $region48
      $region47: #{tpu_custom_call.1} parent=5 // pred_region
        %s260 = ssub.s32 %s16, 2
        // Predicated region
        $region49: #{tpu_custom_call.1} parent=47 // pred_check
          %p261 = pneg %p113
        $region50: #{tpu_custom_call.1} parent=47 // pred_check_branch
          %263 = sbr.rel (%p261) target = $region52
        $region51: #{tpu_custom_call.1} parent=47 // pred_region
          %s264 = sand.u32 %s98, 1
          %s265 = scalar_lea.sflag [#allocation4], %s264
          %s266 = sand.u32 %s98, 1
          %s267 = smul.addr %s266, 32
          %s268 = scalar_lea.vmem [#allocation7], %s267
          %269 = dma.done %s265, 512
        $region52: #{tpu_custom_call.1} parent=47 // pred_fallthru
          _
      $region48: #{tpu_custom_call.1} parent=5 // pred_fallthru
        _
    $region6: #{tpu_custom_call.1} parent=1 // loop_footer
      %s20 = sadd.s32 1, %s16
    $region7: #{tpu_custom_call.1} parent=1 // loop_footer_branch
      %15 = sbr.rel target = $region3
    $region8: #{tpu_custom_call.1} parent=1 // loop_exit
      _
    %270 = vsyncpa [#allocation3], 1
    %s271 = scalar_lea.sflag [#allocation3], 1
    %272 = vsyncpa %s271, 1
    %273 = vsyncpa [#allocation6], 1
    %s274 = scalar_lea.sflag [#allocation6], 1
    %275 = vsyncpa %s274, 1
    %276 = vsyncpa [#allocation4], 1
    %s277 = scalar_lea.sflag [#allocation4], 1
    %278 = vsyncpa %s277, 1

</llo_original>
